<compile_context>
chip_gen: v5e
topology: v5e:2x2
jax: 0.10.0
libtpu: 0.0.40
codegen_flags: <defaults>
</compile_context>

<pallas_src>
import math
import functools

import jax
import jax.numpy as jnp
from jax.experimental import pallas as pl
from jax.experimental.pallas import tpu as pltpu


# ---------------------------------------------------------------------------
# Parameter setup (glue, plain JAX): the `pe` buffer from __init__.
# ---------------------------------------------------------------------------
def make_positional_encoding_table(d_model: int, max_len: int = 5000,
                                   dtype=jnp.float32) -> jnp.ndarray:
    """Replicates the PyTorch __init__ pe buffer, flattened to [max_len, d_model]."""
    position = jnp.arange(max_len, dtype=jnp.float32)[:, None]          # [max_len, 1]
    div_term = jnp.exp(jnp.arange(0, d_model, 2, dtype=jnp.float32)
                       * (-math.log(10000.0) / d_model))                # [d_model/2]
    pe = jnp.zeros((max_len, d_model), dtype=jnp.float32)
    pe = pe.at[:, 0::2].set(jnp.sin(position * div_term))
    pe = pe.at[:, 1::2].set(jnp.cos(position * div_term))
    return pe.astype(dtype)


# ---------------------------------------------------------------------------
# Pallas kernels.  x is presented lane-dense as [S, nb*Dp] (Dp % 128 == 0).
# pe broadcast over batch is done with static, 128-aligned per-batch slices
# (no jnp.tile -> no block-sized VMEM temp, no XLU shuffles).
# ---------------------------------------------------------------------------
def _pe_add_kernel(x_ref, pe_ref, o_ref, *, nb, d):
    pe = pe_ref[...]                                           # (block_s, Dp)
    for b in range(nb):                                        # static unroll
        sl = pl.ds(b * d, d)                                   # 128-aligned
        o_ref[:, sl] = x_ref[:, sl] + pe


def _pe_add_dropout_kernel(x_ref, pe_ref, u_ref, o_ref, *, nb, d, p):
    pe = pe_ref[...]
    scale = jnp.asarray(1.0 / (1.0 - p), o_ref.dtype)
    thresh = jnp.float32(p)
    for b in range(nb):                                        # static unroll
        sl = pl.ds(b * d, d)
        y = (x_ref[:, sl] + pe) * scale
        keep = u_ref[:, sl] >= thresh                          # keep prob = 1-p
        o_ref[:, sl] = jnp.where(keep, y, jnp.zeros_like(y))   # single select


# ---------------------------------------------------------------------------
# Tile sizing: 2-D grid (sequence tiles, batch groups).  Lane blocks are whole
# batch groups (block_b * Dp lanes, always a multiple of 128); block_b divides
# B so there are no partial lane blocks.  Per-block target ~2 MiB keeps the
# double-buffered x-in / u-in / out well under a 32 MiB VMEM budget on every
# generation (v7x has only 64 MiB physical VMEM per TC).
# ---------------------------------------------------------------------------
def _round_up(x: int, m: int) -> int:
    return ((x + m - 1) // m) * m


def _largest_divisor_leq(n: int, cap: int) -> int:
    cap = max(1, min(cap, n))
    for d in range(cap, 0, -1):
        if n % d == 0:
            return d
    return 1


def _choose_blocks(S: int, B: int, Dp: int, dsize: int, target_block_bytes: int):
    if 8 * B * Dp * dsize <= target_block_bytes:
        block_b = B
    else:
        cap = max(1, target_block_bytes // (8 * Dp * dsize))
        block_b = _largest_divisor_leq(B, cap)
    block_b = _largest_divisor_leq(B, min(block_b, 32))   # bound kernel unroll

    row_bytes = block_b * Dp * dsize
    block_s = max(8, target_block_bytes // row_bytes)
    block_s = min(block_s, S)
    if block_s < S:
        block_s = max(8, (block_s // 8) * 8)               # sublane-aligned

    # v7x megacore: prefer >= 2 grid tiles so both TensorCores get work.
    n_tiles = (-(-S // block_s)) * (-(-B // block_b))
    if n_tiles < 2 and S > 8:
        block_s = min(S, _round_up(-(-S // 2), 8))
    return block_s, block_b


# ---------------------------------------------------------------------------
# Wrapper: forward pass of PositionalEncoding (x + pe[:S], then dropout).
# ---------------------------------------------------------------------------
def positional_encoding(x: jnp.ndarray,
                        pe: jnp.ndarray,
                        *,
                        dropout_p: float = 0.1,
                        training: bool = False,
                        seed: int = 0,
                        target_block_bytes: int = 2 * 1024 * 1024) -> jnp.ndarray:
    """x: [S, B, D], pe: [max_len, D].  Returns dropout(x + pe[:S])."""
    S, B, D = x.shape
    dsize = jnp.dtype(x.dtype).itemsize

    # Lane alignment: pad d_model up to a multiple of 128 so every block and
    # every in-kernel per-batch slice is an unmasked multiple of 128 lanes.
    Dp = _round_up(D, 128)
    pe_slice = pe[:S].astype(x.dtype)                           # [S, D]
    if Dp != D:
        x_p = jnp.pad(x, ((0, 0), (0, 0), (0, Dp - D)))
        pe_slice = jnp.pad(pe_slice, ((0, 0), (0, Dp - D)))
    else:
        x_p = x
    x2d = x_p.reshape(S, B * Dp)                                # lane-dense slab

    block_s, block_b = _choose_blocks(S, B, Dp, dsize, target_block_bytes)
    grid = (pl.cdiv(S, block_s), B // block_b)

    x_spec = pl.BlockSpec((block_s, block_b * Dp), lambda i, j: (i, j))
    pe_spec = pl.BlockSpec((block_s, Dp), lambda i, j: (i, 0))
    out_shape = jax.ShapeDtypeStruct((S, B * Dp), x.dtype)

    cparams = pltpu.CompilerParams(
        dimension_semantics=("parallel", "parallel"),
        vmem_limit_bytes=32 * 1024 * 1024)

    apply_dropout = training and dropout_p > 0.0

    if not apply_dropout:
        # Eval-mode dropout is the identity.
        cost = pl.CostEstimate(
            flops=S * B * Dp,
            transcendentals=0,
            bytes_accessed=(2 * S * B * Dp + S * Dp) * dsize)
        out2d = pl.pallas_call(
            functools.partial(_pe_add_kernel, nb=block_b, d=Dp),
            out_shape=out_shape,
            grid_spec=pltpu.PrefetchScalarGridSpec(
                num_scalar_prefetch=0,
                grid=grid,
                in_specs=[x_spec, pe_spec],
                out_specs=x_spec),
            compiler_params=cparams,
            cost_estimate=cost,
            input_output_aliases={0: 0},
        )(x2d, pe_slice)
    else:
        # Wrapper-side uniform randoms (see TODO at top of file).
        key = jax.random.PRNGKey(seed)
        u = jax.random.uniform(key, (S, B * Dp), dtype=jnp.float32)
        cost = pl.CostEstimate(
            flops=4 * S * B * Dp,
            transcendentals=0,
            bytes_accessed=(2 * S * B * Dp + S * Dp) * dsize + S * B * Dp * 4)
        out2d = pl.pallas_call(
            functools.partial(_pe_add_dropout_kernel, nb=block_b, d=Dp,
                              p=float(dropout_p)),
            out_shape=out_shape,
            grid_spec=pltpu.PrefetchScalarGridSpec(
                num_scalar_prefetch=0,
                grid=grid,
                in_specs=[x_spec, pe_spec, x_spec],   # u uses the same tiling as x
                out_specs=x_spec),
            compiler_params=cparams,
            cost_estimate=cost,
            input_output_aliases={0: 0},
        )(x2d, pe_slice, u)

    out = out2d.reshape(S, B, Dp)
    if Dp != D:
        out = out[:, :, :D]
    return out


# ---------------------------------------------------------------------------
# Main
# ---------------------------------------------------------------------------
if __name__ == "__main__":
    dropout_p = 0.2

    # Case 1: module-implied small shape (d_model=32 -> exercises the pad path).
    seq_len, batch, d_model = 8, 2, 32
    max_len = 64
    key = jax.random.PRNGKey(0)
    x = jax.random.normal(key, (seq_len, batch, d_model), dtype=jnp.float32)
    pe = make_positional_encoding_table(d_model, max_len=max_len)
    ref = x + pe[:seq_len][:, None, :]

    out = positional_encoding(x, pe, dropout_p=dropout_p, training=False)
    out = jax.block_until_ready(out)
    assert out.shape == (seq_len, batch, d_model)
    assert jnp.allclose(out, ref, atol=1e-6), "eval-mode mismatch vs. reference"

    # Training mode: every element is either dropped (0) or scaled by 1/(1-p).
    out_tr = positional_encoding(x, pe, dropout_p=dropout_p, training=True, seed=123)
    out_tr = jax.block_until_ready(out_tr)
    assert out_tr.shape == (seq_len, batch, d_model)
    ok = (out_tr == 0.0) | jnp.isclose(out_tr, ref / (1.0 - dropout_p), atol=1e-5)
    assert bool(jnp.all(ok)), "training-mode dropout values inconsistent"

    # Case 2: lane-aligned d_model with a tiny block target to force a
    # multi-tile (sequence x batch) grid.
    seq_len2, batch2, d_model2 = 24, 2, 128
    key2 = jax.random.PRNGKey(1)
    x2 = jax.random.normal(key2, (seq_len2, batch2, d_model2), dtype=jnp.float32)
    pe2 = make_positional_encoding_table(d_model2, max_len=64)
    ref2 = x2 + pe2[:seq_len2][:, None, :]
    out2 = positional_encoding(x2, pe2, dropout_p=dropout_p, training=False,
                               target_block_bytes=4096)
    out2 = jax.block_until_ready(out2)
    assert jnp.allclose(out2, ref2, atol=1e-6), "multi-tile eval-mode mismatch"

    print("KERNEL_OK")
</pallas_src>

<mosaic_0001>
module attributes {stable_mosaic.version = 11 : i64} {
  func.func @_pe_add_kernel(%arg0: i32, %arg1: i32, %arg2: memref<8x256xf32, #tpu.memory_space<vmem>>, %arg3: memref<8x128xf32, #tpu.memory_space<vmem>>, %arg4: memref<8x256xf32, #tpu.memory_space<vmem>>) attributes {dimension_semantics = [#tpu.dimension_semantics<parallel>, #tpu.dimension_semantics<parallel>], iteration_bounds = array<i64: 1, 1>, scalar_prefetch = 0 : i64, scratch_operands = 0 : i64, tpu.core_type = #tpu.core_type<tc>, window_params = [{transform_indices = @transform_0, window_bounds = array<i64: 8, 256>}, {transform_indices = @transform_1, window_bounds = array<i64: 8, 128>}, {transform_indices = @transform_2, window_bounds = array<i64: 8, 256>}]} {
    %c0 = arith.constant 0 : index
    %c0_0 = arith.constant 0 : index
    %0 = vector.load %arg3[%c0, %c0_0] : memref<8x128xf32, #tpu.memory_space<vmem>>, vector<8x128xf32>
    %c0_1 = arith.constant 0 : index
    %c0_2 = arith.constant 0 : index
    %1 = vector.load %arg2[%c0_1, %c0_2] : memref<8x256xf32, #tpu.memory_space<vmem>>, vector<8x128xf32>
    %2 = arith.addf %1, %0 : vector<8x128xf32>
    %c0_3 = arith.constant 0 : index
    %c0_4 = arith.constant 0 : index
    %3 = vector.load %arg4[%c0_3, %c0_4] : memref<8x256xf32, #tpu.memory_space<vmem>>, vector<8x128xf32>
    tpu.vector_store %arg4[%c0_3, %c0_4], %2 {strides = array<i32>} : memref<8x256xf32, #tpu.memory_space<vmem>>, vector<8x128xf32>,
    %c0_5 = arith.constant 0 : index
    %c128 = arith.constant 128 : index
    %4 = vector.load %arg2[%c0_5, %c128] : memref<8x256xf32, #tpu.memory_space<vmem>>, vector<8x128xf32>
    %5 = arith.addf %4, %0 : vector<8x128xf32>
    %c0_6 = arith.constant 0 : index
    %c128_7 = arith.constant 128 : index
    %6 = vector.load %arg4[%c0_6, %c128_7] : memref<8x256xf32, #tpu.memory_space<vmem>>, vector<8x128xf32>
    tpu.vector_store %arg4[%c0_6, %c128_7], %5 {strides = array<i32>} : memref<8x256xf32, #tpu.memory_space<vmem>>, vector<8x128xf32>,
    return
  }
  func.func @transform_0(%arg0: i32, %arg1: i32) -> (i32, i32) {
    %c0_i32 = arith.constant 0 : i32
    return %arg0, %arg1 : i32, i32
  }
  func.func @transform_1(%arg0: i32, %arg1: i32) -> (i32, i32) {
    %c0_i32 = arith.constant 0 : i32
    %c0_i32_0 = arith.constant 0 : i32
    return %arg0, %c0_i32 : i32, i32
  }
  func.func @transform_2(%arg0: i32, %arg1: i32) -> (i32, i32) {
    %c0_i32 = arith.constant 0 : i32
    return %arg0, %arg1 : i32, i32
  }
}

</mosaic_0001>

<llo_original>
// kernel: tpu_custom_call.1
$region0: #{tpu_custom_call.1}
  #allocation0 [shape = 'u32[]', space=smem, size = 0x4, offset = 0x4, fixed_abs, tag = 'smem constant byte address 0x4 - core index']
  #allocation1 [shape = 'u32[72,128]{1,0:T(1,128)}', space=vmem, size = 0x9000, scoped, tag = 'internal scratch']
  %s0 = inlined_call_operand.hbm [shape: f32[8,256], index: 0, kind: input, shape index: {}, may-alias: {0,2}]
  %s1 = inlined_call_operand.vmem [shape: f32[8,128], index: 1, kind: input, shape index: {}]
  %s2 = inlined_call_operand.hbm [shape: f32[8,256], index: 2, kind: output, shape index: {}, may-alias: {0,2}]
  %s3 = sld [smem:[#allocation0]]
  $region22: #{tpu_custom_call.1} parent=0
    _
  %s5 = ssub.s32 1, %s3
  %s6 = scalar_select 0, %s5, %s3
  $region1: #{tpu_custom_call.1} parent=0
    #allocation2 [shape = 'u8[8192]{0}', space=vmem, size = 0x2000, scoped, tag = 'input window, operand 0, single buffered']
    #allocation3 [shape = 's32[1]{0}', space=sflag, size = 0x4, scoped, tag = 'scoped memory for tpu_custom_call.1']
    #allocation4 [shape = 's32[1]{0}', space=sflag, size = 0x4, scoped, tag = 'scoped memory for tpu_custom_call.1']
    #allocation5 [shape = 'u8[8192]{0}', space=vmem, size = 0x2000, scoped, tag = 'output window, operand 0, single buffered']
    %7 = vsyncpa [#allocation3], 0
    %8 = vsyncpa [#allocation4], 0
    // Predicated region
    $region2: #{tpu_custom_call.1} parent=1 // pred_check
      _
    $region3: #{tpu_custom_call.1} parent=1 // pred_check_branch
      %10 = sbr.rel (0) target = $region5
    $region4: #{tpu_custom_call.1} parent=1 // pred_region
      %12 = vsyncadd [#allocation3], 0
      %s14 = sshll.u32 %s0, 4
      %s15 = int_to_ptr.hbm [resolvable:$true] %s14
      %s16 = sshll.u32 [#allocation2], 4
      %s17 = int_to_ptr.vmem [resolvable:$true] %s16
      %19 = dma.hbm_to_vmem [thread:$0]  %s15, 256, %s17, [#allocation3]
    $region5: #{tpu_custom_call.1} parent=1 // pred_fallthru
      _
    // Predicated region
    $region6: #{tpu_custom_call.1} parent=1 // pred_check
      _
    $region7: #{tpu_custom_call.1} parent=1 // pred_check_branch
      %21 = sbr.rel (0) target = $region9
    $region8: #{tpu_custom_call.1} parent=1 // pred_region
      _
    $region9: #{tpu_custom_call.1} parent=1 // pred_fallthru
      _
    // Predicated region
    $region10: #{tpu_custom_call.1} parent=1 // pred_check
      _
    $region11: #{tpu_custom_call.1} parent=1 // pred_check_branch
      %23 = sbr.rel (0) target = $region13
    $region12: #{tpu_custom_call.1} parent=1 // pred_region
      %25 = dma.done [#allocation3], 256
    $region13: #{tpu_custom_call.1} parent=1 // pred_fallthru
      _
    %v26 = vld [vmem:[%s1] sm:$0xff]
    %v27 = vld [vmem:[#allocation2] sm:$0xff]
    %v28 = vadd.f32 %v27, %v26
    %29 = vst [vmem:[#allocation5] sm:$0xff] %v28
    %v30 = vld [vmem:[#allocation2 + $0x8] sm:$0xff]
    %v31 = vadd.f32 %v30, %v26
    %32 = vst [vmem:[#allocation5 + $0x8] sm:$0xff] %v31
    // Predicated region
    $region14: #{tpu_custom_call.1} parent=1 // pred_check
      _
    $region15: #{tpu_custom_call.1} parent=1 // pred_check_branch
      %34 = sbr.rel (0) target = $region17
    $region16: #{tpu_custom_call.1} parent=1 // pred_region
      %36 = vsyncadd [#allocation4], 0
      %s38 = sshll.u32 [#allocation5], 4
      %s39 = int_to_ptr.vmem [resolvable:$true] %s38
      %s40 = sshll.u32 %s2, 4
      %s41 = int_to_ptr.hbm [resolvable:$true] %s40
      %43 = dma.vmem_to_hbm [thread:$0]  %s39, 256, %s41, [#allocation4]
    $region17: #{tpu_custom_call.1} parent=1 // pred_fallthru
      _
    // Predicated region
    $region18: #{tpu_custom_call.1} parent=1 // pred_check
      _
    $region19: #{tpu_custom_call.1} parent=1 // pred_check_branch
      %45 = sbr.rel (0) target = $region21
    $region20: #{tpu_custom_call.1} parent=1 // pred_region
      %47 = dma.done [#allocation4], 256
    $region21: #{tpu_custom_call.1} parent=1 // pred_fallthru
      _
    %48 = vsyncpa [#allocation3], 1
    %49 = vsyncpa [#allocation4], 1

</llo_original>
